<compile_context>
chip_gen: v5e
topology: v5e:2x2
jax: 0.10.0
libtpu: 0.0.40
codegen_flags: <defaults>
</compile_context>

<pallas_src>
import functools

import numpy as np
import jax
import jax.numpy as jnp
from jax.experimental import pallas as pl
from jax.experimental.pallas import tpu as pltpu


# -----------------------------------------------------------------------------
# Fused SelfAtten kernel.  One grid step per batch tile.
#   x_ref   : (Bt, C, HW)   input activations (any float dtype)
#   col_ref : (1, 1, HW)    int32 column index of each flat pixel (p % W)
#   p_ref   : SMEM (16,) f32 scalars:
#             [0:2]  sigmoid(ChannelGate.weight)
#             [2:4]  sigmoid(SpatialGate.weight)
#             [4:7]  ChannelGate 1x3 conv taps
#             [7:16] SpatialGate 3x3 conv taps (row-major)
#   o_ref   : (Bt, C, HW)   output, same dtype as input
#   vpad_ref: VMEM (Bt, C+2, 1)          zero-edged channel-stat scratch
#   spad_ref: VMEM (Bt, 1, HW + 2(W+1))  zero-edged flat gate-map scratch
# -----------------------------------------------------------------------------
def _self_atten_kernel(x_ref, col_ref, p_ref, o_ref, vpad_ref, spad_ref,
                       *, C, H, W):
    HW = H * W
    PAD = W + 1
    Bt = x_ref.shape[0]

    xf = x_ref[...].astype(jnp.float32)                 # (Bt, C, HW)
    xx = xf * xf                                         # shared by both gates

    w_cg0, w_cg1 = p_ref[0], p_ref[1]
    w_sg0, w_sg1 = p_ref[2], p_ref[3]

    # ---------------- ChannelGate: per-channel spatial avg / unbiased std ----
    f_sum = jnp.sum(xf, axis=2, keepdims=True)           # (Bt, C, 1)
    f_sq = jnp.sum(xx, axis=2, keepdims=True)
    f_avg = f_sum * (1.0 / HW)
    f_var = jnp.maximum(f_sq - f_sum * f_avg, 0.0) * (1.0 / (HW - 1))
    f_std = jnp.sqrt(f_var)
    v = 0.5 * (f_avg + f_std) + w_cg0 * f_avg + w_cg1 * f_std

    # 1x3 conv along channels (zero padded): zero-edged scratch + 3 slices.
    vpad_ref[...] = jnp.zeros((Bt, C + 2, 1), jnp.float32)
    vpad_ref[:, 1:C + 1, :] = v
    cg = (p_ref[4] * vpad_ref[:, 0:C, :]
          + p_ref[5] * vpad_ref[:, 1:C + 1, :]
          + p_ref[6] * vpad_ref[:, 2:C + 2, :])
    scale_c = jax.nn.sigmoid(cg)                          # (Bt, C, 1)

    # ---------------- SpatialGate: per-pixel channel avg / unbiased std ------
    s_sum = jnp.sum(xf, axis=1, keepdims=True)            # (Bt, 1, HW)
    s_sq = jnp.sum(xx, axis=1, keepdims=True)
    x_avg = s_sum * (1.0 / C)
    x_var = jnp.maximum(s_sq - s_sum * x_avg, 0.0) * (1.0 / (C - 1))
    x_std = jnp.sqrt(x_var)
    s = (0.5 + w_sg0) * x_avg + (0.5 + w_sg1) * x_std     # (Bt, 1, HW)

    # Column-boundary masks.  Row boundaries come for free from the zero pad of
    # the flat scratch: PAD = W + 1 covers every (+-1 row, +-1 col) offset.
    col = col_ref[...]                                    # (1, 1, HW) int32
    ok_l = col >= 1                                       # source col j-1 valid
    ok_r = col <= W - 2                                   # source col j+1 valid

    spad_ref[...] = jnp.zeros((Bt, 1, HW + 2 * PAD), jnp.float32)

    def put(a):                                           # write map into middle
        spad_ref[:, :, PAD:PAD + HW] = a

    def get(d):                                           # value at p <- map[p+d]
        return spad_ref[:, :, PAD + d:PAD + d + HW]

    # 3x3 conv (cross-correlation, zero pad 1) on the flat single-channel map:
    # 9 shifted static slices + scalar FMAs, with column masks.
    put(s)
    conv = jnp.zeros((Bt, 1, HW), jnp.float32)
    for kh in range(3):
        for kw in range(3):
            t = get((kh - 1) * W + (kw - 1))
            if kw == 0:
                t = jnp.where(ok_l, t, 0.0)
            elif kw == 2:
                t = jnp.where(ok_r, t, 0.0)
            conv = conv + p_ref[7 + kh * 3 + kw] * t

    # AvgPool2d(3, 1, 1) on the conv output (count_include_pad): separable,
    # columns then rows (3 + 3 shifted adds).
    put(conv)
    u = conv + jnp.where(ok_l, get(-1), 0.0) + jnp.where(ok_r, get(1), 0.0)
    put(u)
    pooled = u + get(-W) + get(W)
    scale_s = jax.nn.sigmoid(pooled * (1.0 / 9.0))        # (Bt, 1, HW)

    # ---------------- combine gates & apply (constants match PyTorch) --------
    scale = 0.3333333 * scale_c + 0.666666 * scale_s      # broadcast (Bt,C,HW)
    o_ref[...] = (scale * xf).astype(o_ref.dtype)


def self_atten_forward(x_nchw, params, *, batch_tile=None):
    """SelfAtten forward.  x_nchw: (N, C, H, W) float -> (N, C, H, W)."""
    N, C, H, W = x_nchw.shape
    HW = H * W
    x_flat = x_nchw.reshape(N, C, HW)        # contiguous: metadata-only reshape

    if batch_tile is None:
        batch_tile = 1
        per_batch_bytes = C * HW * x_nchw.dtype.itemsize
        # Many tiny images: group a few per grid step to amortize the
        # ~0.35us/step overhead, but keep >=4 steps so the BlockSpec pipeline
        # overlaps DMA with compute (and both v7x TensorCores get work).
        if N >= 8 and per_batch_bytes <= (128 << 10):
            batch_tile = max(1, min(N // 4, (512 << 10) // per_batch_bytes))
            while N % batch_tile:
                batch_tile -= 1
    assert N % batch_tile == 0, "batch_tile must divide N"

    col_idx = (jnp.arange(HW, dtype=jnp.int32) % W).reshape(1, 1, HW)
    scalars = jnp.concatenate([
        jax.nn.sigmoid(params["cg_weight"].astype(jnp.float32)),
        jax.nn.sigmoid(params["sg_weight"].astype(jnp.float32)),
        params["ch_conv_w"].astype(jnp.float32).reshape(3),
        params["sp_conv_w"].astype(jnp.float32).reshape(9),
    ])                                                     # (16,)

    # VMEM budget: double-buffered in/out blocks + f32 temporaries.
    block_f32_bytes = batch_tile * C * HW * 4
    vmem_limit = int(min(max(32 << 20, 8 * block_f32_bytes), 48 << 20))

    kernel = functools.partial(_self_atten_kernel, C=C, H=H, W=W)
    out_flat = pl.pallas_call(
        kernel,
        out_shape=jax.ShapeDtypeStruct((N, C, HW), x_nchw.dtype),
        grid=(N // batch_tile,),
        in_specs=[
            pl.BlockSpec((batch_tile, C, HW), lambda n: (n, 0, 0)),
            pl.BlockSpec((1, 1, HW), lambda n: (0, 0, 0)),
            pl.BlockSpec(memory_space=pltpu.MemorySpace.SMEM),
        ],
        out_specs=pl.BlockSpec((batch_tile, C, HW), lambda n: (n, 0, 0)),
        scratch_shapes=[
            pltpu.VMEM((batch_tile, C + 2, 1), jnp.float32),
            pltpu.VMEM((batch_tile, 1, HW + 2 * (W + 1)), jnp.float32),
        ],
        compiler_params=pltpu.CompilerParams(
            dimension_semantics=("parallel",),
            vmem_limit_bytes=vmem_limit),
    )(x_flat, col_idx, scalars)
    return out_flat.reshape(N, C, H, W)


# -----------------------------------------------------------------------------
# Pure-JAX reference (same math via lax.conv) for verification.
# -----------------------------------------------------------------------------
def ref_forward(x, p):
    def conv2d(a, w, ph, pw):
        return jax.lax.conv_general_dilated(
            a, w, window_strides=(1, 1), padding=((ph, ph), (pw, pw)),
            dimension_numbers=("NCHW", "OIHW", "NCHW"))

    b, c, h, w = x.shape
    flat = x.reshape(b, c, h * w)
    f_avg = jnp.mean(flat, axis=2)
    f_std = jnp.std(flat, axis=2, ddof=1)
    wcg = jax.nn.sigmoid(p["cg_weight"])
    v = 0.5 * (f_avg + f_std) + wcg[0] * f_avg + wcg[1] * f_std
    cg = conv2d(v[:, None, None, :], p["ch_conv_w"].reshape(1, 1, 1, 3), 0, 1)
    scale_c = jax.nn.sigmoid(jnp.transpose(cg, (0, 3, 2, 1)))    # (b,c,1,1)

    x_avg = jnp.mean(x, axis=1, keepdims=True)
    x_std = jnp.std(x, axis=1, keepdims=True, ddof=1)
    wsg = jax.nn.sigmoid(p["sg_weight"])
    s = (0.5 + wsg[0]) * x_avg + (0.5 + wsg[1]) * x_std
    s = conv2d(s, p["sp_conv_w"].reshape(1, 1, 3, 3), 1, 1)
    s = conv2d(s, jnp.full((1, 1, 3, 3), 1.0 / 9.0, jnp.float32), 1, 1)
    scale_s = jax.nn.sigmoid(s)                                  # (b,1,h,w)

    scale = 0.3333333 * scale_c + 0.666666 * scale_s
    return scale * x


if __name__ == "__main__":
    key = jax.random.PRNGKey(0)
    ks = jax.random.split(key, 5)
    N, C, H, W = 2, 8, 16, 16            # gate_channels = 8

    params = {
        "cg_weight": jax.random.uniform(ks[1], (2,), jnp.float32),
        "ch_conv_w": 0.5 * jax.random.normal(ks[2], (3,), jnp.float32),
        "sg_weight": jax.random.uniform(ks[3], (2,), jnp.float32),
        "sp_conv_w": 0.5 * jax.random.normal(ks[4], (1, 1, 3, 3), jnp.float32),
    }
    x = jax.random.normal(ks[0], (N, C, H, W), jnp.float32)

    out = jax.block_until_ready(self_atten_forward(x, params))

    ref = ref_forward(x, params)
    np.testing.assert_allclose(np.asarray(out), np.asarray(ref),
                               rtol=2e-3, atol=2e-3)
    print("KERNEL_OK")
</pallas_src>

<mosaic_0001>
module attributes {stable_mosaic.version = 11 : i64} {
  func.func @_self_atten_kernel(%arg0: i32, %arg1: memref<1x8x256xf32, #tpu.memory_space<vmem>>, %arg2: memref<1x1x256xi32, #tpu.memory_space<vmem>>, %arg3: memref<16xf32, #tpu.memory_space<smem>>, %arg4: memref<1x8x256xf32, #tpu.memory_space<vmem>>, %arg5: memref<1x10x1xf32, #tpu.memory_space<vmem>>, %arg6: memref<1x1x290xf32, #tpu.memory_space<vmem>>) attributes {dimension_semantics = [#tpu.dimension_semantics<parallel>], iteration_bounds = array<i64: 2>, scalar_prefetch = 0 : i64, scratch_operands = 2 : i64, tpu.core_type = #tpu.core_type<tc>, window_params = [{transform_indices = @transform_0, window_bounds = array<i64: 1, 8, 256>}, {pipeline_mode = #tpu.pipeline_mode<synchronous>, transform_indices = @transform_1, window_bounds = array<i64: 1, 1, 256>}, {transform_indices = @transform_2, window_bounds = array<i64: 16>}, {transform_indices = @transform_3, window_bounds = array<i64: 1, 8, 256>}]} {
    %c0 = arith.constant 0 : index
    %c0_0 = arith.constant 0 : index
    %c0_1 = arith.constant 0 : index
    %0 = vector.load %arg1[%c0, %c0_0, %c0_1] : memref<1x8x256xf32, #tpu.memory_space<vmem>>, vector<1x8x256xf32>
    %1 = arith.mulf %0, %0 : vector<1x8x256xf32>
    %c0_2 = arith.constant 0 : index
    %2 = memref.load %arg3[%c0_2] : memref<16xf32, #tpu.memory_space<smem>>
    %c1 = arith.constant 1 : index
    %3 = memref.load %arg3[%c1] : memref<16xf32, #tpu.memory_space<smem>>
    %c2 = arith.constant 2 : index
    %4 = memref.load %arg3[%c2] : memref<16xf32, #tpu.memory_space<smem>>
    %c3 = arith.constant 3 : index
    %5 = memref.load %arg3[%c3] : memref<16xf32, #tpu.memory_space<smem>>
    %cst = arith.constant dense<0.000000e+00> : vector<1x8xf32>
    %6 = vector.multi_reduction <add>, %0, %cst [2] : vector<1x8x256xf32> to vector<1x8xf32>
    %7 = vector.shape_cast %6 : vector<1x8xf32> to vector<1x8x1xf32>
    %cst_3 = arith.constant dense<0.000000e+00> : vector<1x8xf32>
    %8 = vector.multi_reduction <add>, %1, %cst_3 [2] : vector<1x8x256xf32> to vector<1x8xf32>
    %9 = vector.shape_cast %8 : vector<1x8xf32> to vector<1x8x1xf32>
    %cst_4 = arith.constant 3.906250e-03 : f32
    %10 = vector.broadcast %cst_4 : f32 to vector<1x8x1xf32>
    %11 = arith.mulf %7, %10 : vector<1x8x1xf32>
    %12 = arith.mulf %7, %11 : vector<1x8x1xf32>
    %13 = arith.subf %9, %12 : vector<1x8x1xf32>
    %cst_5 = arith.constant 0.000000e+00 : f32
    %14 = vector.broadcast %cst_5 : f32 to vector<1x8x1xf32>
    %15 = arith.maximumf %13, %14 : vector<1x8x1xf32>
    %cst_6 = arith.constant 0.00392156886 : f32
    %16 = vector.broadcast %cst_6 : f32 to vector<1x8x1xf32>
    %17 = arith.mulf %15, %16 : vector<1x8x1xf32>
    %18 = math.sqrt %17 : vector<1x8x1xf32>
    %19 = arith.addf %11, %18 : vector<1x8x1xf32>
    %cst_7 = arith.constant 5.000000e-01 : f32
    %20 = vector.broadcast %cst_7 : f32 to vector<1x8x1xf32>
    %21 = arith.mulf %20, %19 : vector<1x8x1xf32>
    %22 = vector.broadcast %2 : f32 to vector<1x8x1xf32>
    %23 = arith.mulf %22, %11 : vector<1x8x1xf32>
    %24 = arith.addf %21, %23 : vector<1x8x1xf32>
    %25 = vector.broadcast %3 : f32 to vector<1x8x1xf32>
    %26 = arith.mulf %25, %18 : vector<1x8x1xf32>
    %27 = arith.addf %24, %26 : vector<1x8x1xf32>
    %cst_8 = arith.constant 0.000000e+00 : f32
    %28 = vector.broadcast %cst_8 : f32 to vector<1x10x1xf32>
    %c0_9 = arith.constant 0 : index
    %c0_10 = arith.constant 0 : index
    %c0_11 = arith.constant 0 : index
    %29 = vector.load %arg5[%c0_9, %c0_10, %c0_11] : memref<1x10x1xf32, #tpu.memory_space<vmem>>, vector<1x10x1xf32>
    tpu.vector_store %arg5[%c0_9, %c0_10, %c0_11], %28 {strides = array<i32>} : memref<1x10x1xf32, #tpu.memory_space<vmem>>, vector<1x10x1xf32>,
    %c0_12 = arith.constant 0 : index
    %c1_13 = arith.constant 1 : index
    %c0_14 = arith.constant 0 : index
    %30 = vector.load %arg5[%c0_12, %c1_13, %c0_14] : memref<1x10x1xf32, #tpu.memory_space<vmem>>, vector<1x8x1xf32>
    tpu.vector_store %arg5[%c0_12, %c1_13, %c0_14], %27 {strides = array<i32>} : memref<1x10x1xf32, #tpu.memory_space<vmem>>, vector<1x8x1xf32>,
    %c4 = arith.constant 4 : index
    %31 = memref.load %arg3[%c4] : memref<16xf32, #tpu.memory_space<smem>>
    %c0_15 = arith.constant 0 : index
    %c0_16 = arith.constant 0 : index
    %c0_17 = arith.constant 0 : index
    %32 = vector.load %arg5[%c0_15, %c0_16, %c0_17] : memref<1x10x1xf32, #tpu.memory_space<vmem>>, vector<1x8x1xf32>
    %33 = vector.broadcast %31 : f32 to vector<1x8x1xf32>
    %34 = arith.mulf %33, %32 : vector<1x8x1xf32>
    %c5 = arith.constant 5 : index
    %35 = memref.load %arg3[%c5] : memref<16xf32, #tpu.memory_space<smem>>
    %c0_18 = arith.constant 0 : index
    %c1_19 = arith.constant 1 : index
    %c0_20 = arith.constant 0 : index
    %36 = vector.load %arg5[%c0_18, %c1_19, %c0_20] : memref<1x10x1xf32, #tpu.memory_space<vmem>>, vector<1x8x1xf32>
    %37 = vector.broadcast %35 : f32 to vector<1x8x1xf32>
    %38 = arith.mulf %37, %36 : vector<1x8x1xf32>
    %39 = arith.addf %34, %38 : vector<1x8x1xf32>
    %c6 = arith.constant 6 : index
    %40 = memref.load %arg3[%c6] : memref<16xf32, #tpu.memory_space<smem>>
    %c0_21 = arith.constant 0 : index
    %c2_22 = arith.constant 2 : index
    %c0_23 = arith.constant 0 : index
    %41 = vector.load %arg5[%c0_21, %c2_22, %c0_23] : memref<1x10x1xf32, #tpu.memory_space<vmem>>, vector<1x8x1xf32>
    %42 = vector.broadcast %40 : f32 to vector<1x8x1xf32>
    %43 = arith.mulf %42, %41 : vector<1x8x1xf32>
    %44 = arith.addf %39, %43 : vector<1x8x1xf32>
    %45 = arith.negf %44 : vector<1x8x1xf32>
    %46 = math.exp %45 : vector<1x8x1xf32>
    %cst_24 = arith.constant 1.000000e+00 : f32
    %47 = vector.broadcast %cst_24 : f32 to vector<1x8x1xf32>
    %48 = arith.addf %47, %46 : vector<1x8x1xf32>
    %49 = arith.divf %47, %48 : vector<1x8x1xf32>
    %cst_25 = arith.constant dense<0.000000e+00> : vector<1x256xf32>
    %50 = vector.multi_reduction <add>, %0, %cst_25 [1] : vector<1x8x256xf32> to vector<1x256xf32>
    %51 = vector.shape_cast %50 : vector<1x256xf32> to vector<1x1x256xf32>
    %cst_26 = arith.constant dense<0.000000e+00> : vector<1x256xf32>
    %52 = vector.multi_reduction <add>, %1, %cst_26 [1] : vector<1x8x256xf32> to vector<1x256xf32>
    %53 = vector.shape_cast %52 : vector<1x256xf32> to vector<1x1x256xf32>
    %cst_27 = arith.constant 1.250000e-01 : f32
    %54 = vector.broadcast %cst_27 : f32 to vector<1x1x256xf32>
    %55 = arith.mulf %51, %54 : vector<1x1x256xf32>
    %56 = arith.mulf %51, %55 : vector<1x1x256xf32>
    %57 = arith.subf %53, %56 : vector<1x1x256xf32>
    %cst_28 = arith.constant 0.000000e+00 : f32
    %58 = vector.broadcast %cst_28 : f32 to vector<1x1x256xf32>
    %59 = arith.maximumf %57, %58 : vector<1x1x256xf32>
    %cst_29 = arith.constant 0.142857149 : f32
    %60 = vector.broadcast %cst_29 : f32 to vector<1x1x256xf32>
    %61 = arith.mulf %59, %60 : vector<1x1x256xf32>
    %62 = math.sqrt %61 : vector<1x1x256xf32>
    %cst_30 = arith.constant 5.000000e-01 : f32
    %63 = arith.addf %cst_30, %4 : f32
    %64 = vector.broadcast %63 : f32 to vector<1x1x256xf32>
    %65 = arith.mulf %64, %55 : vector<1x1x256xf32>
    %cst_31 = arith.constant 5.000000e-01 : f32
    %66 = arith.addf %cst_31, %5 : f32
    %67 = vector.broadcast %66 : f32 to vector<1x1x256xf32>
    %68 = arith.mulf %67, %62 : vector<1x1x256xf32>
    %69 = arith.addf %65, %68 : vector<1x1x256xf32>
    %c0_32 = arith.constant 0 : index
    %c0_33 = arith.constant 0 : index
    %c0_34 = arith.constant 0 : index
    %70 = vector.load %arg2[%c0_32, %c0_33, %c0_34] : memref<1x1x256xi32, #tpu.memory_space<vmem>>, vector<1x1x256xi32>
    %c1_i32 = arith.constant 1 : i32
    %71 = vector.broadcast %c1_i32 : i32 to vector<1x1x256xi32>
    %72 = arith.cmpi sge, %70, %71 : vector<1x1x256xi32>
    %c14_i32 = arith.constant 14 : i32
    %73 = vector.broadcast %c14_i32 : i32 to vector<1x1x256xi32>
    %74 = arith.cmpi sle, %70, %73 : vector<1x1x256xi32>
    %cst_35 = arith.constant 0.000000e+00 : f32
    %75 = vector.broadcast %cst_35 : f32 to vector<1x1x290xf32>
    %c0_36 = arith.constant 0 : index
    %c0_37 = arith.constant 0 : index
    %c0_38 = arith.constant 0 : index
    %76 = vector.load %arg6[%c0_36, %c0_37, %c0_38] : memref<1x1x290xf32, #tpu.memory_space<vmem>>, vector<1x1x290xf32>
    tpu.vector_store %arg6[%c0_36, %c0_37, %c0_38], %75 {strides = array<i32>} : memref<1x1x290xf32, #tpu.memory_space<vmem>>, vector<1x1x290xf32>,
    %c0_39 = arith.constant 0 : index
    %c0_40 = arith.constant 0 : index
    %c17 = arith.constant 17 : index
    %77 = vector.load %arg6[%c0_39, %c0_40, %c17] : memref<1x1x290xf32, #tpu.memory_space<vmem>>, vector<1x1x256xf32>
    tpu.vector_store %arg6[%c0_39, %c0_40, %c17], %69 {strides = array<i32>} : memref<1x1x290xf32, #tpu.memory_space<vmem>>, vector<1x1x256xf32>,
    %cst_41 = arith.constant 0.000000e+00 : f32
    %78 = vector.broadcast %cst_41 : f32 to vector<1x1x256xf32>
    %c0_42 = arith.constant 0 : index
    %c0_43 = arith.constant 0 : index
    %c0_44 = arith.constant 0 : index
    %79 = vector.load %arg6[%c0_42, %c0_43, %c0_44] : memref<1x1x290xf32, #tpu.memory_space<vmem>>, vector<1x1x256xf32>
    %cst_45 = arith.constant 0.000000e+00 : f32
    %80 = vector.broadcast %cst_45 : f32 to vector<1x1x256xf32>
    %81 = arith.select %72, %79, %80 : vector<1x1x256xi1>, vector<1x1x256xf32>
    %c7 = arith.constant 7 : index
    %82 = memref.load %arg3[%c7] : memref<16xf32, #tpu.memory_space<smem>>
    %83 = vector.broadcast %82 : f32 to vector<1x1x256xf32>
    %84 = arith.mulf %83, %81 : vector<1x1x256xf32>
    %85 = arith.addf %78, %84 : vector<1x1x256xf32>
    %c0_46 = arith.constant 0 : index
    %c0_47 = arith.constant 0 : index
    %c1_48 = arith.constant 1 : index
    %86 = vector.load %arg6[%c0_46, %c0_47, %c1_48] : memref<1x1x290xf32, #tpu.memory_space<vmem>>, vector<1x1x256xf32>
    %c8 = arith.constant 8 : index
    %87 = memref.load %arg3[%c8] : memref<16xf32, #tpu.memory_space<smem>>
    %88 = vector.broadcast %87 : f32 to vector<1x1x256xf32>
    %89 = arith.mulf %88, %86 : vector<1x1x256xf32>
    %90 = arith.addf %85, %89 : vector<1x1x256xf32>
    %c0_49 = arith.constant 0 : index
    %c0_50 = arith.constant 0 : index
    %c2_51 = arith.constant 2 : index
    %91 = vector.load %arg6[%c0_49, %c0_50, %c2_51] : memref<1x1x290xf32, #tpu.memory_space<vmem>>, vector<1x1x256xf32>
    %cst_52 = arith.constant 0.000000e+00 : f32
    %92 = vector.broadcast %cst_52 : f32 to vector<1x1x256xf32>
    %93 = arith.select %74, %91, %92 : vector<1x1x256xi1>, vector<1x1x256xf32>
    %c9 = arith.constant 9 : index
    %94 = memref.load %arg3[%c9] : memref<16xf32, #tpu.memory_space<smem>>
    %95 = vector.broadcast %94 : f32 to vector<1x1x256xf32>
    %96 = arith.mulf %95, %93 : vector<1x1x256xf32>
    %97 = arith.addf %90, %96 : vector<1x1x256xf32>
    %c0_53 = arith.constant 0 : index
    %c0_54 = arith.constant 0 : index
    %c16 = arith.constant 16 : index
    %98 = vector.load %arg6[%c0_53, %c0_54, %c16] : memref<1x1x290xf32, #tpu.memory_space<vmem>>, vector<1x1x256xf32>
    %cst_55 = arith.constant 0.000000e+00 : f32
    %99 = vector.broadcast %cst_55 : f32 to vector<1x1x256xf32>
    %100 = arith.select %72, %98, %99 : vector<1x1x256xi1>, vector<1x1x256xf32>
    %c10 = arith.constant 10 : index
    %101 = memref.load %arg3[%c10] : memref<16xf32, #tpu.memory_space<smem>>
    %102 = vector.broadcast %101 : f32 to vector<1x1x256xf32>
    %103 = arith.mulf %102, %100 : vector<1x1x256xf32>
    %104 = arith.addf %97, %103 : vector<1x1x256xf32>
    %c0_56 = arith.constant 0 : index
    %c0_57 = arith.constant 0 : index
    %c17_58 = arith.constant 17 : index
    %105 = vector.load %arg6[%c0_56, %c0_57, %c17_58] : memref<1x1x290xf32, #tpu.memory_space<vmem>>, vector<1x1x256xf32>
    %c11 = arith.constant 11 : index
    %106 = memref.load %arg3[%c11] : memref<16xf32, #tpu.memory_space<smem>>
    %107 = vector.broadcast %106 : f32 to vector<1x1x256xf32>
    %108 = arith.mulf %107, %105 : vector<1x1x256xf32>
    %109 = arith.addf %104, %108 : vector<1x1x256xf32>
    %c0_59 = arith.constant 0 : index
    %c0_60 = arith.constant 0 : index
    %c18 = arith.constant 18 : index
    %110 = vector.load %arg6[%c0_59, %c0_60, %c18] : memref<1x1x290xf32, #tpu.memory_space<vmem>>, vector<1x1x256xf32>
    %cst_61 = arith.constant 0.000000e+00 : f32
    %111 = vector.broadcast %cst_61 : f32 to vector<1x1x256xf32>
    %112 = arith.select %74, %110, %111 : vector<1x1x256xi1>, vector<1x1x256xf32>
    %c12 = arith.constant 12 : index
    %113 = memref.load %arg3[%c12] : memref<16xf32, #tpu.memory_space<smem>>
    %114 = vector.broadcast %113 : f32 to vector<1x1x256xf32>
    %115 = arith.mulf %114, %112 : vector<1x1x256xf32>
    %116 = arith.addf %109, %115 : vector<1x1x256xf32>
    %c0_62 = arith.constant 0 : index
    %c0_63 = arith.constant 0 : index
    %c32 = arith.constant 32 : index
    %117 = vector.load %arg6[%c0_62, %c0_63, %c32] : memref<1x1x290xf32, #tpu.memory_space<vmem>>, vector<1x1x256xf32>
    %cst_64 = arith.constant 0.000000e+00 : f32
    %118 = vector.broadcast %cst_64 : f32 to vector<1x1x256xf32>
    %119 = arith.select %72, %117, %118 : vector<1x1x256xi1>, vector<1x1x256xf32>
    %c13 = arith.constant 13 : index
    %120 = memref.load %arg3[%c13] : memref<16xf32, #tpu.memory_space<smem>>
    %121 = vector.broadcast %120 : f32 to vector<1x1x256xf32>
    %122 = arith.mulf %121, %119 : vector<1x1x256xf32>
    %123 = arith.addf %116, %122 : vector<1x1x256xf32>
    %c0_65 = arith.constant 0 : index
    %c0_66 = arith.constant 0 : index
    %c33 = arith.constant 33 : index
    %124 = vector.load %arg6[%c0_65, %c0_66, %c33] : memref<1x1x290xf32, #tpu.memory_space<vmem>>, vector<1x1x256xf32>
    %c14 = arith.constant 14 : index
    %125 = memref.load %arg3[%c14] : memref<16xf32, #tpu.memory_space<smem>>
    %126 = vector.broadcast %125 : f32 to vector<1x1x256xf32>
    %127 = arith.mulf %126, %124 : vector<1x1x256xf32>
    %128 = arith.addf %123, %127 : vector<1x1x256xf32>
    %c0_67 = arith.constant 0 : index
    %c0_68 = arith.constant 0 : index
    %c34 = arith.constant 34 : index
    %129 = vector.load %arg6[%c0_67, %c0_68, %c34] : memref<1x1x290xf32, #tpu.memory_space<vmem>>, vector<1x1x256xf32>
    %cst_69 = arith.constant 0.000000e+00 : f32
    %130 = vector.broadcast %cst_69 : f32 to vector<1x1x256xf32>
    %131 = arith.select %74, %129, %130 : vector<1x1x256xi1>, vector<1x1x256xf32>
    %c15 = arith.constant 15 : index
    %132 = memref.load %arg3[%c15] : memref<16xf32, #tpu.memory_space<smem>>
    %133 = vector.broadcast %132 : f32 to vector<1x1x256xf32>
    %134 = arith.mulf %133, %131 : vector<1x1x256xf32>
    %135 = arith.addf %128, %134 : vector<1x1x256xf32>
    %c0_70 = arith.constant 0 : index
    %c0_71 = arith.constant 0 : index
    %c17_72 = arith.constant 17 : index
    %136 = vector.load %arg6[%c0_70, %c0_71, %c17_72] : memref<1x1x290xf32, #tpu.memory_space<vmem>>, vector<1x1x256xf32>
    tpu.vector_store %arg6[%c0_70, %c0_71, %c17_72], %135 {strides = array<i32>} : memref<1x1x290xf32, #tpu.memory_space<vmem>>, vector<1x1x256xf32>,
    %c0_73 = arith.constant 0 : index
    %c0_74 = arith.constant 0 : index
    %c16_75 = arith.constant 16 : index
    %137 = vector.load %arg6[%c0_73, %c0_74, %c16_75] : memref<1x1x290xf32, #tpu.memory_space<vmem>>, vector<1x1x256xf32>
    %cst_76 = arith.constant 0.000000e+00 : f32
    %138 = vector.broadcast %cst_76 : f32 to vector<1x1x256xf32>
    %139 = arith.select %72, %137, %138 : vector<1x1x256xi1>, vector<1x1x256xf32>
    %140 = arith.addf %135, %139 : vector<1x1x256xf32>
    %c0_77 = arith.constant 0 : index
    %c0_78 = arith.constant 0 : index
    %c18_79 = arith.constant 18 : index
    %141 = vector.load %arg6[%c0_77, %c0_78, %c18_79] : memref<1x1x290xf32, #tpu.memory_space<vmem>>, vector<1x1x256xf32>
    %cst_80 = arith.constant 0.000000e+00 : f32
    %142 = vector.broadcast %cst_80 : f32 to vector<1x1x256xf32>
    %143 = arith.select %74, %141, %142 : vector<1x1x256xi1>, vector<1x1x256xf32>
    %144 = arith.addf %140, %143 : vector<1x1x256xf32>
    %c0_81 = arith.constant 0 : index
    %c0_82 = arith.constant 0 : index
    %c17_83 = arith.constant 17 : index
    %145 = vector.load %arg6[%c0_81, %c0_82, %c17_83] : memref<1x1x290xf32, #tpu.memory_space<vmem>>, vector<1x1x256xf32>
    tpu.vector_store %arg6[%c0_81, %c0_82, %c17_83], %144 {strides = array<i32>} : memref<1x1x290xf32, #tpu.memory_space<vmem>>, vector<1x1x256xf32>,
    %c0_84 = arith.constant 0 : index
    %c0_85 = arith.constant 0 : index
    %c1_86 = arith.constant 1 : index
    %146 = vector.load %arg6[%c0_84, %c0_85, %c1_86] : memref<1x1x290xf32, #tpu.memory_space<vmem>>, vector<1x1x256xf32>
    %147 = arith.addf %144, %146 : vector<1x1x256xf32>
    %c0_87 = arith.constant 0 : index
    %c0_88 = arith.constant 0 : index
    %c33_89 = arith.constant 33 : index
    %148 = vector.load %arg6[%c0_87, %c0_88, %c33_89] : memref<1x1x290xf32, #tpu.memory_space<vmem>>, vector<1x1x256xf32>
    %149 = arith.addf %147, %148 : vector<1x1x256xf32>
    %cst_90 = arith.constant 0.111111112 : f32
    %150 = vector.broadcast %cst_90 : f32 to vector<1x1x256xf32>
    %151 = arith.mulf %149, %150 : vector<1x1x256xf32>
    %152 = arith.negf %151 : vector<1x1x256xf32>
    %153 = math.exp %152 : vector<1x1x256xf32>
    %cst_91 = arith.constant 1.000000e+00 : f32
    %154 = vector.broadcast %cst_91 : f32 to vector<1x1x256xf32>
    %155 = arith.addf %154, %153 : vector<1x1x256xf32>
    %156 = arith.divf %154, %155 : vector<1x1x256xf32>
    %cst_92 = arith.constant 0.333333313 : f32
    %157 = vector.broadcast %cst_92 : f32 to vector<1x8x1xf32>
    %158 = arith.mulf %157, %49 : vector<1x8x1xf32>
    %cst_93 = arith.constant 0.666665971 : f32
    %159 = vector.broadcast %cst_93 : f32 to vector<1x1x256xf32>
    %160 = arith.mulf %159, %156 : vector<1x1x256xf32>
    %161 = vector.broadcast %158 : vector<1x8x1xf32> to vector<1x8x256xf32>
    %162 = vector.broadcast %160 : vector<1x1x256xf32> to vector<1x8x256xf32>
    %163 = arith.addf %161, %162 : vector<1x8x256xf32>
    %164 = arith.mulf %163, %0 : vector<1x8x256xf32>
    %c0_94 = arith.constant 0 : index
    %c0_95 = arith.constant 0 : index
    %c0_96 = arith.constant 0 : index
    %165 = vector.load %arg4[%c0_94, %c0_95, %c0_96] : memref<1x8x256xf32, #tpu.memory_space<vmem>>, vector<1x8x256xf32>
    tpu.vector_store %arg4[%c0_94, %c0_95, %c0_96], %164 {strides = array<i32>} : memref<1x8x256xf32, #tpu.memory_space<vmem>>, vector<1x8x256xf32>,
    return
  }
  func.func @transform_0(%arg0: i32) -> (i32, i32, i32) {
    %c0_i32 = arith.constant 0 : i32
    %c0_i32_0 = arith.constant 0 : i32
    %c0_i32_1 = arith.constant 0 : i32
    return %arg0, %c0_i32, %c0_i32_0 : i32, i32, i32
  }
  func.func @transform_1(%arg0: i32) -> (i32, i32, i32) {
    %c0_i32 = arith.constant 0 : i32
    %c0_i32_0 = arith.constant 0 : i32
    %c0_i32_1 = arith.constant 0 : i32
    %c0_i32_2 = arith.constant 0 : i32
    return %c0_i32, %c0_i32_0, %c0_i32_1 : i32, i32, i32
  }
  func.func @transform_2(%arg0: i32) -> i32 {
    %c0_i32 = arith.constant 0 : i32
    %c0_i32_0 = arith.constant 0 : i32
    return %c0_i32 : i32
  }
  func.func @transform_3(%arg0: i32) -> (i32, i32, i32) {
    %c0_i32 = arith.constant 0 : i32
    %c0_i32_0 = arith.constant 0 : i32
    %c0_i32_1 = arith.constant 0 : i32
    return %arg0, %c0_i32, %c0_i32_0 : i32, i32, i32
  }
}

</mosaic_0001>

<llo_original>
// kernel: tpu_custom_call.1
$region0: #{tpu_custom_call.1}
  #allocation0 [shape = 'u32[]', space=smem, size = 0x4, offset = 0x4, fixed_abs, tag = 'smem constant byte address 0x4 - core index']
  #allocation1 [shape = 'u32[72,128]{1,0:T(1,128)}', space=vmem, size = 0x9000, scoped, tag = 'internal scratch']
  #allocation2 [shape = 'f32[1,10,1]{2,1,0:T(8,128)}', space=vmem, size = 0x2000, scoped, tag = 'scratch operand']
  #allocation3 [shape = 'f32[1,1,290]{2,1,0:T(1,128)}', space=vmem, size = 0x600, scoped, tag = 'scratch operand']
  %s0 = inlined_call_operand.hbm [shape: f32[2,8,256], index: 0, kind: input, shape index: {}]
  %s1 = inlined_call_operand.hbm [shape: s32[1,1,256], index: 1, kind: input, shape index: {}]
  %s2 = inlined_call_operand.vmem [shape: f32[16], index: 2, kind: input, shape index: {}]
  %s3 = inlined_call_operand.hbm [shape: f32[2,8,256], index: 3, kind: output, shape index: {}]
  %s4 = sld [smem:[#allocation0]]
  $region57: #{tpu_custom_call.1} parent=0
    _
  %s6 = ssub.s32 1, %s4
  %s7 = scalar_select 0, %s6, %s4
  $region1: #{tpu_custom_call.1} parent=0
    #allocation4 [shape = 'u8[16384]{0}', space=vmem, size = 0x4000, scoped, tag = 'input window, operand 0']
    #allocation5 [shape = 's32[2]{0}', space=sflag, size = 0x8, scoped, tag = 'scoped memory for tpu_custom_call.1']
    #allocation6 [shape = 's32[2]{0}', space=sflag, size = 0x8, scoped, tag = 'scoped memory for tpu_custom_call.1']
    #allocation7 [shape = 's32[2]{0}', space=sflag, size = 0x8, scoped, tag = 'scoped memory for tpu_custom_call.1']
    #allocation8 [shape = 'u8[1024]{0}', space=vmem, size = 0x400, scoped, tag = 'input window, operand 1, single buffered']
    #allocation9 [shape = 's32[1]{0}', space=sflag, size = 0x4, scoped, tag = 'scoped memory for tpu_custom_call.1']
    #allocation10 [shape = 'u8[512]{0}', space=smem, size = 0x200, scoped, tag = 'input window, operand 2, single buffered']
    #allocation11 [shape = 'u8[16384]{0}', space=vmem, size = 0x4000, scoped, tag = 'output window, operand 0']
    %8 = vsyncpa [#allocation5], 0
    %s9 = scalar_lea.sflag [#allocation5], 1
    %10 = vsyncpa %s9, 0
    %11 = vsyncpa [#allocation9], 0
    %12 = vsyncpa [#allocation7], 0
    %13 = vsyncpa [#allocation6], 0
    %s14 = scalar_lea.sflag [#allocation6], 1
    %15 = vsyncpa %s14, 0
    loop: start=0, step=1, limit=4
    $region2: #{tpu_custom_call.1} parent=1 // loop_pre_header
      _
    $region3: #{tpu_custom_call.1} parent=1 // loop_header
      %s17 = sphi 0, %s21
      %p18 = scmp.ge.s32.totalorder %s17, 4
      %s27 = sphi 0, %s29
      %s30 = sphi 0, %s27
      %s31 = sphi 0, %s30
      %s47 = sphi 0, %s31
      %s51 = sphi 0, %s51
      %s53 = sphi 0, %s51
      %s54 = sphi 0, %s53
      %s68 = sphi 0, %s54
      %s72 = sphi 0, %s72
      %s74 = sphi 0, %s72
      %s75 = sphi 0, %s74
      %s89 = sphi 0, %s75
      %s95 = sphi 0, %s97
      %s98 = sphi 0, %s95
      %s99 = sphi 0, %s98
      %s115 = sphi 0, %s99
    $region4: #{tpu_custom_call.1} parent=1 // loop_header_branch
      %20 = sbr.rel (%p18) target = $region8
    $region5: #{tpu_custom_call.1} parent=1 // loop_body
      %s22 = ssub.s32 %s17, 1
      %s23 = ssub.s32 %s17, 2
      %s24 = sadd.s32 %s17, 1
      %s25 = ssub.s32 %s17, %s24
      %p26 = scmp.eq.s32.totalorder %s25, 0
      %s28 = sadd.s32 %s27, 1
      %s29 = scalar_select %p26, %s27, %s28
      %p32 = pneg %p26
      %p33 = scmp.eq.s32.totalorder %s17, 1
      %p34 = por %p32, %p33
      %p35 = scmp.ne.s32.totalorder %s27, %s30
      %p36 = scmp.eq.s32.totalorder %s17, 0
      %p37 = por %p35, %p36
      %p38 = scmp.ne.s32.totalorder %s27, %s30
      %p39 = scmp.eq.s32.totalorder %s22, 1
      %p40 = por %p38, %p39
      %p41 = scmp.ne.s32.totalorder %s30, %s31
      %p42 = scmp.eq.s32.totalorder %s22, 0
      %p43 = por %p41, %p42
      %p44 = scmp.ne.s32.totalorder %s30, %s31
      %p45 = scmp.eq.s32.totalorder %s23, 1
      %p46 = por %p44, %p45
      %p48 = scmp.ne.s32.totalorder %s31, %s47
      %p49 = scmp.eq.s32.totalorder %s23, 0
      %p50 = por %p48, %p49
      %s52 = sadd.s32 %s51, 1
      %p55 = scmp.eq.s32.totalorder %s17, 1
      %p56 = scmp.ne.s32.totalorder %s51, %s53
      %p57 = scmp.eq.s32.totalorder %s17, 0
      %p58 = por %p56, %p57
      %p59 = scmp.ne.s32.totalorder %s51, %s53
      %p60 = scmp.eq.s32.totalorder %s22, 1
      %p61 = por %p59, %p60
      %p62 = scmp.ne.s32.totalorder %s53, %s54
      %p63 = scmp.eq.s32.totalorder %s22, 0
      %p64 = por %p62, %p63
      %p65 = scmp.ne.s32.totalorder %s53, %s54
      %p66 = scmp.eq.s32.totalorder %s23, 1
      %p67 = por %p65, %p66
      %p69 = scmp.ne.s32.totalorder %s54, %s68
      %p70 = scmp.eq.s32.totalorder %s23, 0
      %p71 = por %p69, %p70
      %s73 = sadd.s32 %s72, 1
      %p76 = scmp.eq.s32.totalorder %s17, 1
      %p77 = scmp.ne.s32.totalorder %s72, %s74
      %p78 = scmp.eq.s32.totalorder %s17, 0
      %p79 = por %p77, %p78
      %p80 = scmp.ne.s32.totalorder %s72, %s74
      %p81 = scmp.eq.s32.totalorder %s22, 1
      %p82 = por %p80, %p81
      %p83 = scmp.ne.s32.totalorder %s74, %s75
      %p84 = scmp.eq.s32.totalorder %s22, 0
      %p85 = por %p83, %p84
      %p86 = scmp.ne.s32.totalorder %s74, %s75
      %p87 = scmp.eq.s32.totalorder %s23, 1
      %p88 = por %p86, %p87
      %p90 = scmp.ne.s32.totalorder %s75, %s89
      %p91 = scmp.eq.s32.totalorder %s23, 0
      %p92 = por %p90, %p91
      %s93 = ssub.s32 %s17, %s24
      %p94 = scmp.eq.s32.totalorder %s93, 0
      %s96 = sadd.s32 %s95, 1
      %s97 = scalar_select %p94, %s95, %s96
      %p100 = pneg %p94
      %p101 = scmp.eq.s32.totalorder %s17, 1
      %p102 = por %p100, %p101
      %p103 = scmp.ne.s32.totalorder %s95, %s98
      %p104 = scmp.eq.s32.totalorder %s17, 0
      %p105 = por %p103, %p104
      %p106 = scmp.ne.s32.totalorder %s95, %s98
      %p107 = scmp.eq.s32.totalorder %s22, 1
      %p108 = por %p106, %p107
      %p109 = scmp.ne.s32.totalorder %s98, %s99
      %p110 = scmp.eq.s32.totalorder %s22, 0
      %p111 = por %p109, %p110
      %p112 = scmp.ne.s32.totalorder %s98, %s99
      %p113 = scmp.eq.s32.totalorder %s23, 1
      %p114 = por %p112, %p113
      %p116 = scmp.ne.s32.totalorder %s99, %s115
      %p117 = scmp.eq.s32.totalorder %s23, 0
      %p118 = por %p116, %p117
      %p119 = scmp.le.s32.totalorder 1, %s17
      %p120 = scmp.lt.s32.totalorder %s17, 3
      %p121 = pnand %p119, %p120
      %p122 = pneg %p121
      // Predicated region
      $region9: #{tpu_custom_call.1} parent=5 // pred_check
        _
      $region10: #{tpu_custom_call.1} parent=5 // pred_check_branch
        %124 = sbr.rel (%p121) target = $region12
      $region11: #{tpu_custom_call.1} parent=5 // pred_region
        %s125 = ssub.s32 %s17, 1
        // Predicated region
        $region13: #{tpu_custom_call.1} parent=11 // pred_check
          %p126 = pneg %p64
        $region14: #{tpu_custom_call.1} parent=11 // pred_check_branch
          %128 = sbr.rel (%p126) target = $region16
        $region15: #{tpu_custom_call.1} parent=11 // pred_region
          %130 = vsyncadd [#allocation9], 0
          %s132 = sshll.u32 %s1, 4
          %s133 = int_to_ptr.hbm [resolvable:$true] %s132
          %s134 = sshll.u32 [#allocation8], 4
          %s135 = int_to_ptr.vmem [resolvable:$true] %s134
          %137 = dma.hbm_to_vmem [thread:$0]  %s133, 32, %s135, [#allocation9]
        $region16: #{tpu_custom_call.1} parent=11 // pred_fallthru
          _
        // Predicated region
        $region17: #{tpu_custom_call.1} parent=11 // pred_check
          %p138 = pneg %p85
        $region18: #{tpu_custom_call.1} parent=11 // pred_check_branch
          %140 = sbr.rel (%p138) target = $region20
        $region19: #{tpu_custom_call.1} parent=11 // pred_region
          %142 = vsyncadd [#allocation7], 0
          %s144 = sshll.u32 %s2, 4
          %s145 = int_to_ptr.vmem [resolvable:$true] %s144
          %147 = dma.vmem_to_smem %s145, 16, [#allocation10], [#allocation7]
        $region20: #{tpu_custom_call.1} parent=11 // pred_fallthru
          _
      $region12: #{tpu_custom_call.1} parent=5 // pred_fallthru
        _
      %p148 = scmp.lt.s32.totalorder %s17, 2
      // Predicated region
      $region21: #{tpu_custom_call.1} parent=5 // pred_check
        %p149 = pneg %p148
      $region22: #{tpu_custom_call.1} parent=5 // pred_check_branch
        %151 = sbr.rel (%p149) target = $region24
      $region23: #{tpu_custom_call.1} parent=5 // pred_region
        // Predicated region
        $region25: #{tpu_custom_call.1} parent=23 // pred_check
          %p152 = pneg %p37
        $region26: #{tpu_custom_call.1} parent=23 // pred_check_branch
          %154 = sbr.rel (%p152) target = $region28
        $region27: #{tpu_custom_call.1} parent=23 // pred_region
          %s155 = sand.u32 %s27, 1
          %s156 = scalar_lea.sflag [#allocation5], %s155
          %s157 = sand.u32 %s27, 1
          %s158 = smul.addr %s157, 16
          %s159 = scalar_lea.vmem [#allocation4], %s158
          %161 = vsyncadd %s156, 0
          %s162 = smul.addr %s17, 2
          %s163 = smul.addr %s162, 8
          %s164 = scalar_lea.hbm %s0, %s163
          %s166 = sshll.u32 %s164, 4
          %s167 = int_to_ptr.hbm [resolvable:$true] %s166
          %s168 = sshll.u32 %s159, 4
          %s169 = int_to_ptr.vmem [resolvable:$true] %s168
          %171 = dma.hbm_to_vmem [thread:$0]  %s167, 256, %s169, %s156
        $region28: #{tpu_custom_call.1} parent=23 // pred_fallthru
          _
      $region24: #{tpu_custom_call.1} parent=5 // pred_fallthru
        _
      %p172 = scmp.le.s32.totalorder 1, %s17
      %p173 = scmp.lt.s32.totalorder %s17, 3
      %p174 = pnand %p172, %p173
      %p175 = pneg %p174
      // Predicated region
      $region29: #{tpu_custom_call.1} parent=5 // pred_check
        _
      $region30: #{tpu_custom_call.1} parent=5 // pred_check_branch
        %177 = sbr.rel (%p174) target = $region32
      $region31: #{tpu_custom_call.1} parent=5 // pred_region
        %s178 = ssub.s32 %s17, 1
        %s179 = sand.u32 %s30, 1
        %s180 = scalar_lea.sflag [#allocation5], %s179
        %s181 = sand.u32 %s30, 1
        %s182 = smul.addr %s181, 16
        %s183 = scalar_lea.vmem [#allocation4], %s182
        // Predicated region
        $region33: #{tpu_custom_call.1} parent=31 // pred_check
          %p184 = pneg %p43
        $region34: #{tpu_custom_call.1} parent=31 // pred_check_branch
          %186 = sbr.rel (%p184) target = $region36
        $region35: #{tpu_custom_call.1} parent=31 // pred_region
          %188 = dma.done %s180, 256
        $region36: #{tpu_custom_call.1} parent=31 // pred_fallthru
          _
        // Predicated region
        $region37: #{tpu_custom_call.1} parent=31 // pred_check
          %p189 = pneg %p64
        $region38: #{tpu_custom_call.1} parent=31 // pred_check_branch
          %191 = sbr.rel (%p189) target = $region40
        $region39: #{tpu_custom_call.1} parent=31 // pred_region
          %193 = dma.done [#allocation9], 32
        $region40: #{tpu_custom_call.1} parent=31 // pred_fallthru
          _
        // Predicated region
        $region41: #{tpu_custom_call.1} parent=31 // pred_check
          %p194 = pneg %p85
        $region42: #{tpu_custom_call.1} parent=31 // pred_check_branch
          %196 = sbr.rel (%p194) target = $region44
        $region43: #{tpu_custom_call.1} parent=31 // pred_region
          %198 = dma.done [#allocation7], 16
        $region44: #{tpu_custom_call.1} parent=31 // pred_fallthru
          _
        %199 = sfence
        %s200 = sand.u32 %s30, 1
        %s201 = scalar_lea.sflag [#allocation5], %s200
        %s202 = sand.u32 %s30, 1
        %s203 = smul.addr %s202, 16
        %s204 = scalar_lea.vmem [#allocation4], %s203
        %p205 = pneg %p43
        %p206 = pneg %p40
        %p207 = pneg %p64
        %p208 = pneg %p61
        %p209 = pneg %p85
        %p210 = pneg %p82
        %p211 = pneg %p111
        %p212 = pneg %p108
        %s213 = sand.u32 %s98, 1
        %s214 = scalar_lea.sflag [#allocation6], %s213
        %s215 = sand.u32 %s98, 1
        %s216 = smul.addr %s215, 16
        %s217 = scalar_lea.vmem [#allocation11], %s216
        %v218 = vld [vmem:[%s183] sm:$0xff]
        %v219 = vld [vmem:[%s183 + $0x8] sm:$0xff]
        %v220 = vmul.f32 %v218, %v218
        %v221 = vmul.f32 %v219, %v219
        %s222 = sld [smem:[#allocation10]]
        %s223 = sld [smem:[#allocation10 + $0x1]]
        %s224 = sld [smem:[#allocation10 + $0x2]]
        %s225 = sld [smem:[#allocation10 + $0x3]]
        %v226 = vadd.f32 %v218, %v219
        %227 = vadd.xlane.f32.xlu0 %v226
        %v228 = vpop.xlane.xlu0 %227
        %v229 = vadd.f32 %v220, %v221
        %230 = vadd.xlane.f32.xlu0 %v229
        %v231 = vpop.xlane.xlu0 %230
        %v232 = vmul.f32 %v228, 0.00390625
        %v233 = vmul.f32 %v228, %v232
        %v234 = vsub.f32 %v231, %v233
        %v235 = vmax.f32 %v234, 0.0
        %v236 = vmul.f32 %v235, 0.003921569
        %v237 = vrsqrt.pop %v236
        %v238 = vmul.f32 %v237, %v236
        %v239 = vmul.f32 %v238, %v237
        %v240 = vmul.f32 0.5, %v239
        %v241 = vsub.f32 1.5, %v240
        %v242 = vmul.f32 %v237, %v241
        %v243 = vmul.f32 %v236, %v242
        %vm244 = vcmp.eq.f32.partialorder %v236, inf
        %v245 = vsel %vm244, %v236, %v243
        %vm246 = vcmp.eq.f32.partialorder %v236, 0.0
        %v247 = vand.u32 %v236, 2147483648
        %v248 = vsel %vm246, %v247, %v245
        %v249 = vadd.f32 %v232, %v248
        %v250 = vmul.f32 %v249, 0.5
        %v251 = vstv %s222
        %v252 = vmul.f32 %v251, %v232
        %v253 = vadd.f32 %v250, %v252
        %v254 = vstv %s223
        %v255 = vmul.f32 %v254, %v248
        %v256 = vadd.f32 %v253, %v255
        %vm257 = vcmask 7168
        %258 = vst.msk [vmem:[#allocation2] sm:$0xff] %vm257, 0.0
        %vm259 = vcmask 1024
        %260 = vst.msk [vmem:[#allocation2 + $0x8] sm:$0x3] %vm259, 0.0
        %261 = vst.msk [vmem:[#allocation2 + $0x1] sm:$0xff] %vm257, %v256
        %s262 = sld [smem:[#allocation10 + $0x4]]
        %v263 = vld [vmem:[#allocation2] sm:$0xff]
        %v264 = vstv %s262
        %v265 = vmul.f32 %v264, %v263
        %s266 = sld [smem:[#allocation10 + $0x5]]
        %v267 = vld [vmem:[#allocation2 + $0x1] sm:$0xff]
        %v268 = vstv %s266
        %v269 = vmul.f32 %v268, %v267
        %v270 = vadd.f32 %v265, %v269
        %s271 = sld [smem:[#allocation10 + $0x6]]
        %v272 = vld [vmem:[#allocation2 + $0x2] sm:$0xff]
        %v273 = vstv %s271
        %v274 = vmul.f32 %v273, %v272
        %v275 = vadd.f32 %v270, %v274
        %v276 = vxor.u32 %v275, 2147483648
        %v277 = vmul.f32 %v276, 1.442695
        %v278 = vpow.pop %v277
        %v279 = vadd.f32 %v278, 1.0
        %v280 = vrcp.pop %v279
        %v281 = vmul.f32 %v279, %v280
        %v282 = vsub.f32 1.0, %v281
        %v283 = vmul.f32 %v280, %v282
        %v284 = vadd.f32 %v280, %v283
        %vm285 = vweird.f32 %v279
        %vm286 = vweird.f32 %v280
        %vm287 = vmor %vm285, %vm286
        %v288 = vsel %vm287, %v280, %v284
        %v289 = vand.u32 2147483647, %v279
        %vm290 = vcmp.eq.f32.partialorder %v289, 8.507059e+37
        %v291 = vand.u32 %v279, 2147483648
        %v292 = vor.u32 1.1754944e-38, %v291
        %v293 = vsel %vm290, %v292, %v288
        %v294 = vmul.f32 1.0, %v293
        %v295 = vrot.slane %v218, 4
        %v296 = vadd.f32 %v218, %v295
        %v297 = vrot.slane %v296, 2
        %v298 = vadd.f32 %v296, %v297
        %v299 = vrot.slane %v298, 1
        %v300 = vadd.f32 %v298, %v299
        %v301 = vrot.slane %v219, 4
        %v302 = vadd.f32 %v219, %v301
        %v303 = vrot.slane %v302, 2
        %v304 = vadd.f32 %v302, %v303
        %v305 = vrot.slane %v304, 1
        %v306 = vadd.f32 %v304, %v305
        %v307 = vrot.slane %v220, 4
        %v308 = vadd.f32 %v220, %v307
        %v309 = vrot.slane %v308, 2
        %v310 = vadd.f32 %v308, %v309
        %v311 = vrot.slane %v310, 1
        %v312 = vadd.f32 %v310, %v311
        %v313 = vrot.slane %v221, 4
        %v314 = vadd.f32 %v221, %v313
        %v315 = vrot.slane %v314, 2
        %v316 = vadd.f32 %v314, %v315
        %v317 = vrot.slane %v316, 1
        %v318 = vadd.f32 %v316, %v317
        %v319 = vmul.f32 %v300, 0.125
        %v320 = vmul.f32 %v306, 0.125
        %v321 = vmul.f32 %v300, %v319
        %v322 = vmul.f32 %v306, %v320
        %v323 = vsub.f32 %v312, %v321
        %v324 = vsub.f32 %v318, %v322
        %v325 = vmax.f32 %v323, 0.0
        %v326 = vmax.f32 %v324, 0.0
        %v327 = vmul.f32 %v325, 0.14285715
        %v328 = vmul.f32 %v326, 0.14285715
        %v329 = vrsqrt.pop %v327
        %v330 = vmul.f32 %v329, %v327
        %v331 = vmul.f32 %v330, %v329
        %v332 = vmul.f32 0.5, %v331
        %v333 = vsub.f32 1.5, %v332
        %v334 = vmul.f32 %v329, %v333
        %v335 = vmul.f32 %v327, %v334
        %vm336 = vcmp.eq.f32.partialorder %v327, inf
        %v337 = vsel %vm336, %v327, %v335
        %vm338 = vcmp.eq.f32.partialorder %v327, 0.0
        %v339 = vand.u32 %v327, 2147483648
        %v340 = vsel %vm338, %v339, %v337
        %v341 = vrsqrt.pop %v328
        %v342 = vmul.f32 %v341, %v328
        %v343 = vmul.f32 %v342, %v341
        %v344 = vmul.f32 0.5, %v343
        %v345 = vsub.f32 1.5, %v344
        %v346 = vmul.f32 %v341, %v345
        %v347 = vmul.f32 %v328, %v346
        %vm348 = vcmp.eq.f32.partialorder %v328, inf
        %v349 = vsel %vm348, %v328, %v347
        %vm350 = vcmp.eq.f32.partialorder %v328, 0.0
        %v351 = vand.u32 %v328, 2147483648
        %v352 = vsel %vm350, %v351, %v349
        %s353 = sadd.f32 %s224, 0.5
        %v354 = vstv %s353
        %v355 = vmul.f32 %v354, %v319
        %v356 = vmul.f32 %v354, %v320
        %s357 = sadd.f32 %s225, 0.5
        %v358 = vstv %s357
        %v359 = vmul.f32 %v358, %v340
        %v360 = vmul.f32 %v358, %v352
        %v361 = vadd.f32 %v355, %v359
        %v362 = vadd.f32 %v356, %v360
        %v363 = vld [vmem:[#allocation8] sm:$0x3]
        %vm364 = vcmp.ge.s32.totalorder %v363, 1
        %vm365 = vcmp.le.s32.totalorder %v363, 14
        %v366 = vlaneseq
        %vm367 = vcmp.ge.s32.totalorder %v366, 0
        %vm368 = vcmp.lt.s32.totalorder %v366, 290
        %vm369 = vmand %vm367, %vm368
        %370 = vst.msk [vmem:[#allocation3] sm:$0x7] %vm369, 0.0
        %v373 = vrot.slane %v362, 7
        %vm374 = vcmask 1040384
        %v375 = vsel %vm374, %v361, %v373
        %376 = vrot.lane.b32.xlu0 %v375, 17
        %v377 = vpop.permute.xlu0 %376
        %v378 = vrot.slane %v377, 7
        %vm379 = vcmask 138240
        %v380 = vsel %vm379, %v378, %v377
        %vm382 = vcmp.ge.s32.totalorder %v366, 17
        %vm383 = vcmp.lt.s32.totalorder %v366, 273
        %vm384 = vmand %vm382, %vm383
        %385 = vst.msk [vmem:[#allocation3] sm:$0x7] %vm384, %v380
        %v386 = vld [vmem:[#allocation3] sm:$0x3]
        %v387 = vsel %vm364, %v386, 0.0
        %s388 = sld [smem:[#allocation10 + $0x7]]
        %v389 = vstv %s388
        %v390 = vmul.f32 %v389, %v387
        %v391 = vadd.f32 %v390, 0.0
        %v392 = vld [vmem:[#allocation3] sm:$0x7]
        %s393 = sld [smem:[#allocation10 + $0x8]]
        %v394 = vstv %s393
        %v395 = vmul.f32 %v394, %v392
        %397 = vrot.lane.b32.xlu0 %v395, 127
        %v398 = vpop.permute.xlu0 %397
        %v399 = vrot.slane %v398, 1
        %vm400 = vcmask 1039360
        %v401 = vsel %vm400, %v398, %v399
        %v403 = vadd.f32 %v391, %v401
        %405 = vrot.lane.b32.xlu0 %v392, 126
        %v406 = vpop.permute.xlu0 %405
        %v407 = vrot.slane %v406, 1
        %vm408 = vcmask 1031168
        %v409 = vsel %vm408, %v406, %v407
        %v411 = vsel %vm365, %v409, 0.0
        %s412 = sld [smem:[#allocation10 + $0x9]]
        %v413 = vstv %s412
        %v414 = vmul.f32 %v413, %v411
        %v415 = vadd.f32 %v403, %v414
        %416 = vrot.lane.b32.xlu0 %v392, 112
        %v417 = vpop.permute.xlu0 %416
        %v418 = vrot.slane %v417, 1
        %vm419 = vcmask 916480
        %v420 = vsel %vm419, %v417, %v418
        %v422 = vsel %vm364, %v420, 0.0
        %s423 = sld [smem:[#allocation10 + $0xa]]
        %v424 = vstv %s423
        %v425 = vmul.f32 %v424, %v422
        %v426 = vadd.f32 %v415, %v425
        %s427 = sld [smem:[#allocation10 + $0xb]]
        %v428 = vstv %s427
        %v429 = vmul.f32 %v428, %v392
        %431 = vrot.lane.b32.xlu0 %v429, 111
        %v432 = vpop.permute.xlu0 %431
        %v433 = vrot.slane %v432, 1
        %vm434 = vcmask 908288
        %v435 = vsel %vm434, %v432, %v433
        %v437 = vadd.f32 %v426, %v435
        %438 = vrot.lane.b32.xlu0 %v392, 110
        %v439 = vpop.permute.xlu0 %438
        %v440 = vrot.slane %v439, 1
        %vm441 = vcmask 900096
        %v442 = vsel %vm441, %v439, %v440
        %v444 = vsel %vm365, %v442, 0.0
        %s445 = sld [smem:[#allocation10 + $0xc]]
        %v446 = vstv %s445
        %v447 = vmul.f32 %v446, %v444
        %v448 = vadd.f32 %v437, %v447
        %449 = vrot.lane.b32.xlu0 %v392, 96
        %v450 = vpop.permute.xlu0 %449
        %v451 = vrot.slane %v450, 1
        %vm452 = vcmask 785408
        %v453 = vsel %vm452, %v450, %v451
        %v455 = vsel %vm364, %v453, 0.0
        %s456 = sld [smem:[#allocation10 + $0xd]]
        %v457 = vstv %s456
        %v458 = vmul.f32 %v457, %v455
        %v459 = vadd.f32 %v448, %v458
        %s460 = sld [smem:[#allocation10 + $0xe]]
        %v461 = vstv %s460
        %v462 = vmul.f32 %v461, %v392
        %464 = vrot.lane.b32.xlu0 %v462, 95
        %v465 = vpop.permute.xlu0 %464
        %v466 = vrot.slane %v465, 1
        %vm467 = vcmask 777216
        %v468 = vsel %vm467, %v465, %v466
        %v470 = vadd.f32 %v459, %v468
        %471 = vrot.lane.b32.xlu0 %v392, 94
        %v472 = vpop.permute.xlu0 %471
        %v473 = vrot.slane %v472, 1
        %vm474 = vcmask 769024
        %v475 = vsel %vm474, %v472, %v473
        %v477 = vsel %vm365, %v475, 0.0
        %s478 = sld [smem:[#allocation10 + $0xf]]
        %v479 = vstv %s478
        %v480 = vmul.f32 %v479, %v477
        %v481 = vadd.f32 %v470, %v480
        %483 = vrot.lane.b32.xlu0 %v481, 17
        %v484 = vpop.permute.xlu0 %483
        %v485 = vrot.slane %v484, 7
        %v486 = vsel %vm379, %v485, %v484
        %488 = vst.msk [vmem:[#allocation3] sm:$0x7] %vm384, %v486
        %v489 = vld [vmem:[#allocation3] sm:$0x7]
        %491 = vrot.lane.b32.xlu0 %v489, 112
        %v492 = vpop.permute.xlu0 %491
        %v493 = vrot.slane %v492, 1
        %v494 = vsel %vm419, %v492, %v493
        %v496 = vsel %vm364, %v494, 0.0
        %v497 = vadd.f32 %v481, %v496
        %498 = vrot.lane.b32.xlu0 %v489, 110
        %v499 = vpop.permute.xlu0 %498
        %v500 = vrot.slane %v499, 1
        %v501 = vsel %vm441, %v499, %v500
        %v503 = vsel %vm365, %v501, 0.0
        %v504 = vadd.f32 %v497, %v503
        %506 = vrot.lane.b32.xlu0 %v504, 17
        %v507 = vpop.permute.xlu0 %506
        %v508 = vrot.slane %v507, 7
        %v509 = vsel %vm379, %v508, %v507
        %511 = vst.msk [vmem:[#allocation3] sm:$0x7] %vm384, %v509
        %v512 = vld [vmem:[#allocation3] sm:$0x7]
        %514 = vrot.lane.b32.xlu0 %v512, 127
        %v515 = vpop.permute.xlu0 %514
        %v516 = vrot.slane %v515, 1
        %v517 = vsel %vm400, %v515, %v516
        %v519 = vadd.f32 %v504, %v517
        %520 = vrot.lane.b32.xlu0 %v512, 95
        %v521 = vpop.permute.xlu0 %520
        %v522 = vrot.slane %v521, 1
        %v523 = vsel %vm467, %v521, %v522
        %v525 = vadd.f32 %v519, %v523
        %v526 = vmul.f32 %v525, 0.11111111
        %v527 = vxor.u32 %v526, 2147483648
        %v528 = vmul.f32 %v527, 1.442695
        %v529 = vpow.pop %v528
        %v530 = vadd.f32 %v529, 1.0
        %v531 = vrcp.pop %v530
        %v532 = vmul.f32 %v530, %v531
        %v533 = vsub.f32 1.0, %v532
        %v534 = vmul.f32 %v531, %v533
        %v535 = vadd.f32 %v531, %v534
        %vm536 = vweird.f32 %v530
        %vm537 = vweird.f32 %v531
        %vm538 = vmor %vm536, %vm537
        %v539 = vsel %vm538, %v531, %v535
        %v540 = vand.u32 2147483647, %v530
        %vm541 = vcmp.eq.f32.partialorder %v540, 8.507059e+37
        %v542 = vand.u32 %v530, 2147483648
        %v543 = vor.u32 1.1754944e-38, %v542
        %v544 = vsel %vm541, %v543, %v539
        %v545 = vmul.f32 1.0, %v544
        %v546 = vmul.f32 %v294, 0.3333333
        %v547 = vmul.f32 %v545, 0.666666
        %549 = vset.pattern.permute.xlu0 0
        %550 = vperm.xlu0 %549, %v546
        %v551 = vpop.permute.xlu0 %550
        %v554 = vperm.slane %v547, 0
        %v555 = vperm.slane %v547, 1
        %v558 = vadd.f32 %v551, %v554
        %v559 = vadd.f32 %v551, %v555
        %v560 = vmul.f32 %v558, %v218
        %v561 = vmul.f32 %v559, %v219
        %562 = vst [vmem:[%s217] sm:$0xff] %v560
        %563 = vst [vmem:[%s217 + $0x8] sm:$0xff] %v561
        %s564 = sand.u32 %s98, 1
        %s565 = scalar_lea.sflag [#allocation6], %s564
        %s566 = sand.u32 %s98, 1
        %s567 = smul.addr %s566, 16
        %s568 = scalar_lea.vmem [#allocation11], %s567
        // Predicated region
        $region45: #{tpu_custom_call.1} parent=31 // pred_check
          %p569 = pneg %p108
        $region46: #{tpu_custom_call.1} parent=31 // pred_check_branch
          %571 = sbr.rel (%p569) target = $region48
        $region47: #{tpu_custom_call.1} parent=31 // pred_region
          %573 = vsyncadd %s565, 0
          %s574 = smul.addr %s22, 2
          %s575 = smul.addr %s574, 8
          %s576 = scalar_lea.hbm %s3, %s575
          %s578 = sshll.u32 %s568, 4
          %s579 = int_to_ptr.vmem [resolvable:$true] %s578
          %s580 = sshll.u32 %s576, 4
          %s581 = int_to_ptr.hbm [resolvable:$true] %s580
          %583 = dma.vmem_to_hbm [thread:$0]  %s579, 256, %s581, %s565
        $region48: #{tpu_custom_call.1} parent=31 // pred_fallthru
          _
      $region32: #{tpu_custom_call.1} parent=5 // pred_fallthru
        _
      %p584 = scmp.le.s32.totalorder 2, %s17
      // Predicated region
      $region49: #{tpu_custom_call.1} parent=5 // pred_check
        %p585 = pneg %p584
      $region50: #{tpu_custom_call.1} parent=5 // pred_check_branch
        %587 = sbr.rel (%p585) target = $region52
      $region51: #{tpu_custom_call.1} parent=5 // pred_region
        %s588 = ssub.s32 %s17, 2
        // Predicated region
        $region53: #{tpu_custom_call.1} parent=51 // pred_check
          %p589 = pneg %p114
        $region54: #{tpu_custom_call.1} parent=51 // pred_check_branch
          %591 = sbr.rel (%p589) target = $region56
        $region55: #{tpu_custom_call.1} parent=51 // pred_region
          %s592 = sand.u32 %s99, 1
          %s593 = scalar_lea.sflag [#allocation6], %s592
          %s594 = sand.u32 %s99, 1
          %s595 = smul.addr %s594, 16
          %s596 = scalar_lea.vmem [#allocation11], %s595
          %598 = dma.done %s593, 256
        $region56: #{tpu_custom_call.1} parent=51 // pred_fallthru
          _
      $region52: #{tpu_custom_call.1} parent=5 // pred_fallthru
        _
    $region6: #{tpu_custom_call.1} parent=1 // loop_footer
      %s21 = sadd.s32 1, %s17
    $region7: #{tpu_custom_call.1} parent=1 // loop_footer_branch
      %16 = sbr.rel target = $region3
    $region8: #{tpu_custom_call.1} parent=1 // loop_exit
      _
    %599 = vsyncpa [#allocation5], 1
    %s600 = scalar_lea.sflag [#allocation5], 1
    %601 = vsyncpa %s600, 1
    %602 = vsyncpa [#allocation9], 1
    %603 = vsyncpa [#allocation6], 1
    %s604 = scalar_lea.sflag [#allocation6], 1
    %605 = vsyncpa %s604, 1
    %606 = vsyncpa [#allocation7], 1
    %s607 = scalar_lea.sflag [#allocation7], 1
    %608 = vsyncpa %s607, 1

</llo_original>
